<compile_context>
chip_gen: v7x
topology: tpu7x:2x2x1
jax: 0.10.0
libtpu: 0.0.40
codegen_flags: <defaults>
</compile_context>

<pallas_src>
import jax
import jax.numpy as jnp
from jax.experimental import pallas as pl
from jax.experimental.pallas import tpu as pltpu

LANES = 128        # TPU vreg lane width
BLOCK_ROWS = 8     # sublane rows per grid step (8 x 128 = 1024 samples / step)


def _recip(x):
    # EUP approximate reciprocal (issues in a separate bundle slot from the VALU).
    # Switch to approx=False if bit-tighter agreement with the torch reference is needed.
    return pl.reciprocal(x, approx=True)


def wertheim_kernel(x_ref, o_ref):
    # x_ref: (12, BLOCK_ROWS, LANES) f32; leading-axis rows are:
    #  0: softplus(Delta)[i,0]  1: softplus(Delta)[i,1]
    #  2: softplus(Delta)[j,0]  3: softplus(Delta)[j,1]
    #  4: invT   5: r   6: N[:,0]   7: N[:,1]
    #  8: rho[:,0] (Aap)  9: rho[:,1] (Adp)  10: rho[:,2] (Bam)  11: rho[:,3] (Bdm)
    di0 = x_ref[0]
    di1 = x_ref[1]
    dj0 = x_ref[2]
    dj1 = x_ref[3]
    invT = x_ref[4]
    r = x_ref[5]
    NAa = x_ref[6]
    NAd = x_ref[7]
    rhoAap = x_ref[8]
    rhoAdp = x_ref[9]
    rhoBam = x_ref[10]
    rhoBdm = x_ref[11]

    dref = 0.034 * (jnp.exp(1960.0 * invT) - 1.0)

    D_AaAd = di0 * di1 * dref
    D_BaBd = dj0 * dj1 * dref
    D_AaBd = di0 * dj1 * dref
    D_AdBa = dj0 * di1 * dref

    # ----- B-site self association (2-site Wertheim closed form) -----
    mask_bb_a = rhoBam == 0.0
    mask_bb_d = rhoBdm == 0.0
    adj_bb_a = jnp.where(mask_bb_a, 1.0, D_BaBd * rhoBam)
    adj_bb_d = jnp.where(mask_bb_d, 1.0, D_BaBd * rhoBdm)
    inv2_bb_a = 0.5 * _recip(adj_bb_a)
    inv2_bb_d = 0.5 * _recip(adj_bb_d)
    # Guarded rho reciprocals: the guarded value is only consumed on the
    # unselected branch of the jnp.where below, so forward semantics match torch.
    inv2_rBa = 0.5 * _recip(jnp.where(mask_bb_a, 1.0, rhoBam))
    inv2_rBd = 0.5 * _recip(jnp.where(mask_bb_d, 1.0, rhoBdm))
    # sqrt argument is symmetric in (adj_a, adj_d): compute once, reuse for both temps.
    sq_bb = jnp.sqrt(adj_bb_a ** 2 - 2.0 * adj_bb_a * (adj_bb_d - 1.0)
                     + (adj_bb_d + 1.0) ** 2)
    XaBm_t = sq_bb * inv2_bb_a + 0.5 - rhoBdm * inv2_rBa - inv2_bb_a
    XdBm_t = sq_bb * inv2_bb_d + 0.5 - rhoBam * inv2_rBd - inv2_bb_d
    XaBm = jnp.where(mask_bb_d, 1.0,
                     jnp.where(mask_bb_a, 2.0 * inv2_bb_d, XaBm_t))
    XdBm = jnp.where(mask_bb_a, 1.0,
                     jnp.where(mask_bb_d, 2.0 * inv2_bb_a, XdBm_t))

    # ----- A-site self association -----
    mask_aa_a = rhoAap == 0.0
    mask_aa_d = rhoAdp == 0.0
    adj_aa_a = jnp.where(mask_aa_a, 1.0, D_AaAd * rhoAap)
    adj_aa_d = jnp.where(mask_aa_d, 1.0, D_AaAd * rhoAdp)
    inv2_aa_a = 0.5 * _recip(adj_aa_a)
    inv2_aa_d = 0.5 * _recip(adj_aa_d)
    inv2_rAa = 0.5 * _recip(jnp.where(mask_aa_a, 1.0, rhoAap))
    inv2_rAd = 0.5 * _recip(jnp.where(mask_aa_d, 1.0, rhoAdp))
    sq_aa = jnp.sqrt(adj_aa_a ** 2 - 2.0 * adj_aa_a * (adj_aa_d - 1.0)
                     + (adj_aa_d + 1.0) ** 2)
    XaAp_t = sq_aa * inv2_aa_a + 0.5 - rhoAdp * inv2_rAa - inv2_aa_a
    XdAp_t = sq_aa * inv2_aa_d + 0.5 - rhoAap * inv2_rAd - inv2_aa_d
    XaAp = jnp.where(mask_aa_d, 1.0,
                     jnp.where(mask_aa_a, 2.0 * inv2_aa_d, XaAp_t))
    XdAp = jnp.where(mask_aa_a, 1.0,
                     jnp.where(mask_aa_d, 2.0 * inv2_aa_a, XdAp_t))

    # ----- cross association -----
    # XaAm = 1 / (1 + cA)   =>   log(XaAm / XaAp) = -log1p(cA) - log(XaAp)
    cA = D_AaBd * rhoBdm * XdBm
    cD = D_AdBa * rhoBam * XaBm
    termAa = jnp.where(NAa == 0.0, 0.0,
                       NAa * (-jnp.log1p(cA) - jnp.log(XaAp)
                              + (XaAp - 1.0) * 0.5))
    termAd = jnp.where(NAd == 0.0, 0.0,
                       NAd * (-jnp.log1p(cD) - jnp.log(XdAp)
                              + (XdAp - 1.0) * 0.5))
    termB = r * (rhoBam * (1.0 - XaBm) + rhoBdm * (1.0 - XdBm)) * 0.5

    o_ref[...] = termAa + termAd + termB


def wertheim_forward(Delta, i, j, invT, r, q, N, rho, *, block_rows=BLOCK_ROWS):
    """Pallas implementation of Wertheim.forward. `q` is unused (as in torch)."""
    del q
    r = jnp.ravel(r).astype(jnp.float32)
    invT = jnp.ravel(invT).astype(jnp.float32)
    B = r.shape[0]

    # Softplus hoisted onto the tiny (M, 2) Delta table (only M*2 distinct values),
    # then gathered per sample: removes 4 per-sample transcendentals from the kernel.
    D = jax.nn.softplus(Delta.astype(jnp.float32))
    Di = D[i]  # (B, 2)
    Dj = D[j]  # (B, 2)

    N = N.astype(jnp.float32)
    rho = rho.astype(jnp.float32)

    # TODO(synk): in a larger pipeline, fuse this pack at the producer (or pass the
    # (M, 2) softplus table + i/j via SMEM scalar prefetch) so the (12, B) slab is
    # not an extra un-fused HBM round trip.
    x = jnp.stack(
        [Di[:, 0], Di[:, 1], Dj[:, 0], Dj[:, 1],
         invT, r,
         N[:, 0], N[:, 1],
         rho[:, 0], rho[:, 1], rho[:, 2], rho[:, 3]],
        axis=0,
    )  # (12, B) f32

    samples_per_step = block_rows * LANES
    n_steps = pl.cdiv(B, samples_per_step)
    Bp = n_steps * samples_per_step
    if Bp != B:
        # Zero padding is safe: N=0 and r=0 in the pad lanes make the padded
        # outputs exactly 0; they are sliced off below.
        x = jnp.pad(x, ((0, 0), (0, Bp - B)))
    nrows = Bp // LANES
    x3 = x.reshape(12, nrows, LANES)

    out = pl.pallas_call(
        wertheim_kernel,
        out_shape=jax.ShapeDtypeStruct((nrows, LANES), jnp.float32),
        grid_spec=pltpu.PrefetchScalarGridSpec(
            num_scalar_prefetch=0,
            grid=(n_steps,),
            in_specs=[pl.BlockSpec((12, block_rows, LANES),
                                   lambda b: (0, b, 0))],
            out_specs=pl.BlockSpec((block_rows, LANES), lambda b: (b, 0)),
        ),
        compiler_params=pltpu.CompilerParams(
            # Parallel 1-D grid: shards grid steps across v7x's 2 TensorCores;
            # near-zero cost on single-TC v5e/v6e.
            dimension_semantics=("parallel",)),
    )(x3)
    return out.reshape(Bp)[:B]


if __name__ == "__main__":
    key = jax.random.PRNGKey(0)
    kd, ki, kj, kt, kr, kq, kn, krho, kz = jax.random.split(key, 9)

    M = 4       # number of components (rows of Delta)
    B = 2000    # samples; non-multiple of 1024 exercises the padded tail,
                # and the grid has 2 parallel steps (keeps both v7x TCs busy).

    Delta = jax.random.normal(kd, (M, 2), dtype=jnp.float32)
    i = jax.random.randint(ki, (B,), 0, M)
    j = jax.random.randint(kj, (B,), 0, M)
    invT = jax.random.uniform(kt, (B, 1), minval=1.0 / 350.0, maxval=1.0 / 250.0,
                              dtype=jnp.float32)
    r = jax.random.uniform(kr, (B, 1), minval=1.0, maxval=3.0, dtype=jnp.float32)
    q = jax.random.uniform(kq, (B, 1), dtype=jnp.float32)  # unused by forward
    N = jax.random.randint(kn, (B, 2), 0, 3).astype(jnp.float32)
    rho = jax.random.uniform(krho, (B, 4), minval=0.0, maxval=0.02,
                             dtype=jnp.float32)
    # introduce exact zeros so the masked_fill / where branches are exercised
    zero_mask = jax.random.bernoulli(kz, 0.1, (B, 4))
    rho = jnp.where(zero_mask, 0.0, rho)

    out = wertheim_forward(Delta, i, j, invT, r, q, N, rho)
    jax.block_until_ready(out)
    assert out.shape == (B,)
    assert bool(jnp.all(jnp.isfinite(out)))
    print("KERNEL_OK")
</pallas_src>

<mosaic_0001>
module attributes {stable_mosaic.version = 11 : i64} {
  func.func @wertheim_kernel(%arg0: i32, %arg1: memref<12x8x128xf32, #tpu.memory_space<vmem>>, %arg2: memref<8x128xf32, #tpu.memory_space<vmem>>) attributes {dimension_semantics = [#tpu.dimension_semantics<parallel>], iteration_bounds = array<i64: 2>, scalar_prefetch = 0 : i64, scratch_operands = 0 : i64, tpu.core_type = #tpu.core_type<tc>, window_params = [{transform_indices = @transform_0, window_bounds = array<i64: 12, 8, 128>}, {transform_indices = @transform_1, window_bounds = array<i64: 8, 128>}]} {
    %c0 = arith.constant 0 : index
    %c0_0 = arith.constant 0 : index
    %c0_1 = arith.constant 0 : index
    %0 = vector.load %arg1[%c0, %c0_0, %c0_1] : memref<12x8x128xf32, #tpu.memory_space<vmem>>, vector<1x8x128xf32>
    %1 = vector.shape_cast %0 : vector<1x8x128xf32> to vector<8x128xf32>
    %c1 = arith.constant 1 : index
    %c0_2 = arith.constant 0 : index
    %c0_3 = arith.constant 0 : index
    %2 = vector.load %arg1[%c1, %c0_2, %c0_3] : memref<12x8x128xf32, #tpu.memory_space<vmem>>, vector<1x8x128xf32>
    %3 = vector.shape_cast %2 : vector<1x8x128xf32> to vector<8x128xf32>
    %c2 = arith.constant 2 : index
    %c0_4 = arith.constant 0 : index
    %c0_5 = arith.constant 0 : index
    %4 = vector.load %arg1[%c2, %c0_4, %c0_5] : memref<12x8x128xf32, #tpu.memory_space<vmem>>, vector<1x8x128xf32>
    %5 = vector.shape_cast %4 : vector<1x8x128xf32> to vector<8x128xf32>
    %c3 = arith.constant 3 : index
    %c0_6 = arith.constant 0 : index
    %c0_7 = arith.constant 0 : index
    %6 = vector.load %arg1[%c3, %c0_6, %c0_7] : memref<12x8x128xf32, #tpu.memory_space<vmem>>, vector<1x8x128xf32>
    %7 = vector.shape_cast %6 : vector<1x8x128xf32> to vector<8x128xf32>
    %c4 = arith.constant 4 : index
    %c0_8 = arith.constant 0 : index
    %c0_9 = arith.constant 0 : index
    %8 = vector.load %arg1[%c4, %c0_8, %c0_9] : memref<12x8x128xf32, #tpu.memory_space<vmem>>, vector<1x8x128xf32>
    %9 = vector.shape_cast %8 : vector<1x8x128xf32> to vector<8x128xf32>
    %c5 = arith.constant 5 : index
    %c0_10 = arith.constant 0 : index
    %c0_11 = arith.constant 0 : index
    %10 = vector.load %arg1[%c5, %c0_10, %c0_11] : memref<12x8x128xf32, #tpu.memory_space<vmem>>, vector<1x8x128xf32>
    %11 = vector.shape_cast %10 : vector<1x8x128xf32> to vector<8x128xf32>
    %c6 = arith.constant 6 : index
    %c0_12 = arith.constant 0 : index
    %c0_13 = arith.constant 0 : index
    %12 = vector.load %arg1[%c6, %c0_12, %c0_13] : memref<12x8x128xf32, #tpu.memory_space<vmem>>, vector<1x8x128xf32>
    %13 = vector.shape_cast %12 : vector<1x8x128xf32> to vector<8x128xf32>
    %c7 = arith.constant 7 : index
    %c0_14 = arith.constant 0 : index
    %c0_15 = arith.constant 0 : index
    %14 = vector.load %arg1[%c7, %c0_14, %c0_15] : memref<12x8x128xf32, #tpu.memory_space<vmem>>, vector<1x8x128xf32>
    %15 = vector.shape_cast %14 : vector<1x8x128xf32> to vector<8x128xf32>
    %c8 = arith.constant 8 : index
    %c0_16 = arith.constant 0 : index
    %c0_17 = arith.constant 0 : index
    %16 = vector.load %arg1[%c8, %c0_16, %c0_17] : memref<12x8x128xf32, #tpu.memory_space<vmem>>, vector<1x8x128xf32>
    %17 = vector.shape_cast %16 : vector<1x8x128xf32> to vector<8x128xf32>
    %c9 = arith.constant 9 : index
    %c0_18 = arith.constant 0 : index
    %c0_19 = arith.constant 0 : index
    %18 = vector.load %arg1[%c9, %c0_18, %c0_19] : memref<12x8x128xf32, #tpu.memory_space<vmem>>, vector<1x8x128xf32>
    %19 = vector.shape_cast %18 : vector<1x8x128xf32> to vector<8x128xf32>
    %c10 = arith.constant 10 : index
    %c0_20 = arith.constant 0 : index
    %c0_21 = arith.constant 0 : index
    %20 = vector.load %arg1[%c10, %c0_20, %c0_21] : memref<12x8x128xf32, #tpu.memory_space<vmem>>, vector<1x8x128xf32>
    %21 = vector.shape_cast %20 : vector<1x8x128xf32> to vector<8x128xf32>
    %c11 = arith.constant 11 : index
    %c0_22 = arith.constant 0 : index
    %c0_23 = arith.constant 0 : index
    %22 = vector.load %arg1[%c11, %c0_22, %c0_23] : memref<12x8x128xf32, #tpu.memory_space<vmem>>, vector<1x8x128xf32>
    %23 = vector.shape_cast %22 : vector<1x8x128xf32> to vector<8x128xf32>
    %cst = arith.constant 1.960000e+03 : f32
    %24 = vector.broadcast %cst : f32 to vector<8x128xf32>
    %25 = arith.mulf %24, %9 : vector<8x128xf32>
    %26 = math.exp %25 : vector<8x128xf32>
    %cst_24 = arith.constant 1.000000e+00 : f32
    %27 = vector.broadcast %cst_24 : f32 to vector<8x128xf32>
    %28 = arith.subf %26, %27 : vector<8x128xf32>
    %cst_25 = arith.constant 3.400000e-02 : f32
    %29 = vector.broadcast %cst_25 : f32 to vector<8x128xf32>
    %30 = arith.mulf %29, %28 : vector<8x128xf32>
    %31 = arith.mulf %1, %3 : vector<8x128xf32>
    %32 = arith.mulf %31, %30 : vector<8x128xf32>
    %33 = arith.mulf %5, %7 : vector<8x128xf32>
    %34 = arith.mulf %33, %30 : vector<8x128xf32>
    %35 = arith.mulf %1, %7 : vector<8x128xf32>
    %36 = arith.mulf %35, %30 : vector<8x128xf32>
    %37 = arith.mulf %5, %3 : vector<8x128xf32>
    %38 = arith.mulf %37, %30 : vector<8x128xf32>
    %cst_26 = arith.constant 0.000000e+00 : f32
    %39 = vector.broadcast %cst_26 : f32 to vector<8x128xf32>
    %40 = arith.cmpf oeq, %21, %39 : vector<8x128xf32>
    %cst_27 = arith.constant 0.000000e+00 : f32
    %41 = vector.broadcast %cst_27 : f32 to vector<8x128xf32>
    %42 = arith.cmpf oeq, %23, %41 : vector<8x128xf32>
    %43 = arith.mulf %34, %21 : vector<8x128xf32>
    %cst_28 = arith.constant 1.000000e+00 : f32
    %44 = vector.broadcast %cst_28 : f32 to vector<8x128xf32>
    %45 = arith.select %40, %44, %43 : vector<8x128xi1>, vector<8x128xf32>
    %46 = arith.mulf %34, %23 : vector<8x128xf32>
    %cst_29 = arith.constant 1.000000e+00 : f32
    %47 = vector.broadcast %cst_29 : f32 to vector<8x128xf32>
    %48 = arith.select %42, %47, %46 : vector<8x128xi1>, vector<8x128xf32>
    %49 = tpu.reciprocal %45 {approx = true} : vector<8x128xf32> -> vector<8x128xf32>
    %cst_30 = arith.constant 5.000000e-01 : f32
    %50 = vector.broadcast %cst_30 : f32 to vector<8x128xf32>
    %51 = arith.mulf %50, %49 : vector<8x128xf32>
    %52 = tpu.reciprocal %48 {approx = true} : vector<8x128xf32> -> vector<8x128xf32>
    %cst_31 = arith.constant 5.000000e-01 : f32
    %53 = vector.broadcast %cst_31 : f32 to vector<8x128xf32>
    %54 = arith.mulf %53, %52 : vector<8x128xf32>
    %cst_32 = arith.constant 1.000000e+00 : f32
    %55 = vector.broadcast %cst_32 : f32 to vector<8x128xf32>
    %56 = arith.select %40, %55, %21 : vector<8x128xi1>, vector<8x128xf32>
    %57 = tpu.reciprocal %56 {approx = true} : vector<8x128xf32> -> vector<8x128xf32>
    %cst_33 = arith.constant 5.000000e-01 : f32
    %58 = vector.broadcast %cst_33 : f32 to vector<8x128xf32>
    %59 = arith.mulf %58, %57 : vector<8x128xf32>
    %cst_34 = arith.constant 1.000000e+00 : f32
    %60 = vector.broadcast %cst_34 : f32 to vector<8x128xf32>
    %61 = arith.select %42, %60, %23 : vector<8x128xi1>, vector<8x128xf32>
    %62 = tpu.reciprocal %61 {approx = true} : vector<8x128xf32> -> vector<8x128xf32>
    %cst_35 = arith.constant 5.000000e-01 : f32
    %63 = vector.broadcast %cst_35 : f32 to vector<8x128xf32>
    %64 = arith.mulf %63, %62 : vector<8x128xf32>
    %65 = arith.mulf %45, %45 : vector<8x128xf32>
    %cst_36 = arith.constant 2.000000e+00 : f32
    %66 = vector.broadcast %cst_36 : f32 to vector<8x128xf32>
    %67 = arith.mulf %66, %45 : vector<8x128xf32>
    %cst_37 = arith.constant 1.000000e+00 : f32
    %68 = vector.broadcast %cst_37 : f32 to vector<8x128xf32>
    %69 = arith.subf %48, %68 : vector<8x128xf32>
    %70 = arith.mulf %67, %69 : vector<8x128xf32>
    %71 = arith.subf %65, %70 : vector<8x128xf32>
    %cst_38 = arith.constant 1.000000e+00 : f32
    %72 = vector.broadcast %cst_38 : f32 to vector<8x128xf32>
    %73 = arith.addf %48, %72 : vector<8x128xf32>
    %74 = arith.mulf %73, %73 : vector<8x128xf32>
    %75 = arith.addf %71, %74 : vector<8x128xf32>
    %76 = math.sqrt %75 : vector<8x128xf32>
    %77 = arith.mulf %76, %51 : vector<8x128xf32>
    %cst_39 = arith.constant 5.000000e-01 : f32
    %78 = vector.broadcast %cst_39 : f32 to vector<8x128xf32>
    %79 = arith.addf %77, %78 : vector<8x128xf32>
    %80 = arith.mulf %23, %59 : vector<8x128xf32>
    %81 = arith.subf %79, %80 : vector<8x128xf32>
    %82 = arith.subf %81, %51 : vector<8x128xf32>
    %83 = arith.mulf %76, %54 : vector<8x128xf32>
    %cst_40 = arith.constant 5.000000e-01 : f32
    %84 = vector.broadcast %cst_40 : f32 to vector<8x128xf32>
    %85 = arith.addf %83, %84 : vector<8x128xf32>
    %86 = arith.mulf %21, %64 : vector<8x128xf32>
    %87 = arith.subf %85, %86 : vector<8x128xf32>
    %88 = arith.subf %87, %54 : vector<8x128xf32>
    %cst_41 = arith.constant 2.000000e+00 : f32
    %89 = vector.broadcast %cst_41 : f32 to vector<8x128xf32>
    %90 = arith.mulf %89, %54 : vector<8x128xf32>
    %91 = arith.select %40, %90, %82 : vector<8x128xi1>, vector<8x128xf32>
    %cst_42 = arith.constant 1.000000e+00 : f32
    %92 = vector.broadcast %cst_42 : f32 to vector<8x128xf32>
    %93 = arith.select %42, %92, %91 : vector<8x128xi1>, vector<8x128xf32>
    %cst_43 = arith.constant 2.000000e+00 : f32
    %94 = vector.broadcast %cst_43 : f32 to vector<8x128xf32>
    %95 = arith.mulf %94, %51 : vector<8x128xf32>
    %96 = arith.select %42, %95, %88 : vector<8x128xi1>, vector<8x128xf32>
    %cst_44 = arith.constant 1.000000e+00 : f32
    %97 = vector.broadcast %cst_44 : f32 to vector<8x128xf32>
    %98 = arith.select %40, %97, %96 : vector<8x128xi1>, vector<8x128xf32>
    %cst_45 = arith.constant 0.000000e+00 : f32
    %99 = vector.broadcast %cst_45 : f32 to vector<8x128xf32>
    %100 = arith.cmpf oeq, %17, %99 : vector<8x128xf32>
    %cst_46 = arith.constant 0.000000e+00 : f32
    %101 = vector.broadcast %cst_46 : f32 to vector<8x128xf32>
    %102 = arith.cmpf oeq, %19, %101 : vector<8x128xf32>
    %103 = arith.mulf %32, %17 : vector<8x128xf32>
    %cst_47 = arith.constant 1.000000e+00 : f32
    %104 = vector.broadcast %cst_47 : f32 to vector<8x128xf32>
    %105 = arith.select %100, %104, %103 : vector<8x128xi1>, vector<8x128xf32>
    %106 = arith.mulf %32, %19 : vector<8x128xf32>
    %cst_48 = arith.constant 1.000000e+00 : f32
    %107 = vector.broadcast %cst_48 : f32 to vector<8x128xf32>
    %108 = arith.select %102, %107, %106 : vector<8x128xi1>, vector<8x128xf32>
    %109 = tpu.reciprocal %105 {approx = true} : vector<8x128xf32> -> vector<8x128xf32>
    %cst_49 = arith.constant 5.000000e-01 : f32
    %110 = vector.broadcast %cst_49 : f32 to vector<8x128xf32>
    %111 = arith.mulf %110, %109 : vector<8x128xf32>
    %112 = tpu.reciprocal %108 {approx = true} : vector<8x128xf32> -> vector<8x128xf32>
    %cst_50 = arith.constant 5.000000e-01 : f32
    %113 = vector.broadcast %cst_50 : f32 to vector<8x128xf32>
    %114 = arith.mulf %113, %112 : vector<8x128xf32>
    %cst_51 = arith.constant 1.000000e+00 : f32
    %115 = vector.broadcast %cst_51 : f32 to vector<8x128xf32>
    %116 = arith.select %100, %115, %17 : vector<8x128xi1>, vector<8x128xf32>
    %117 = tpu.reciprocal %116 {approx = true} : vector<8x128xf32> -> vector<8x128xf32>
    %cst_52 = arith.constant 5.000000e-01 : f32
    %118 = vector.broadcast %cst_52 : f32 to vector<8x128xf32>
    %119 = arith.mulf %118, %117 : vector<8x128xf32>
    %cst_53 = arith.constant 1.000000e+00 : f32
    %120 = vector.broadcast %cst_53 : f32 to vector<8x128xf32>
    %121 = arith.select %102, %120, %19 : vector<8x128xi1>, vector<8x128xf32>
    %122 = tpu.reciprocal %121 {approx = true} : vector<8x128xf32> -> vector<8x128xf32>
    %cst_54 = arith.constant 5.000000e-01 : f32
    %123 = vector.broadcast %cst_54 : f32 to vector<8x128xf32>
    %124 = arith.mulf %123, %122 : vector<8x128xf32>
    %125 = arith.mulf %105, %105 : vector<8x128xf32>
    %cst_55 = arith.constant 2.000000e+00 : f32
    %126 = vector.broadcast %cst_55 : f32 to vector<8x128xf32>
    %127 = arith.mulf %126, %105 : vector<8x128xf32>
    %cst_56 = arith.constant 1.000000e+00 : f32
    %128 = vector.broadcast %cst_56 : f32 to vector<8x128xf32>
    %129 = arith.subf %108, %128 : vector<8x128xf32>
    %130 = arith.mulf %127, %129 : vector<8x128xf32>
    %131 = arith.subf %125, %130 : vector<8x128xf32>
    %cst_57 = arith.constant 1.000000e+00 : f32
    %132 = vector.broadcast %cst_57 : f32 to vector<8x128xf32>
    %133 = arith.addf %108, %132 : vector<8x128xf32>
    %134 = arith.mulf %133, %133 : vector<8x128xf32>
    %135 = arith.addf %131, %134 : vector<8x128xf32>
    %136 = math.sqrt %135 : vector<8x128xf32>
    %137 = arith.mulf %136, %111 : vector<8x128xf32>
    %cst_58 = arith.constant 5.000000e-01 : f32
    %138 = vector.broadcast %cst_58 : f32 to vector<8x128xf32>
    %139 = arith.addf %137, %138 : vector<8x128xf32>
    %140 = arith.mulf %19, %119 : vector<8x128xf32>
    %141 = arith.subf %139, %140 : vector<8x128xf32>
    %142 = arith.subf %141, %111 : vector<8x128xf32>
    %143 = arith.mulf %136, %114 : vector<8x128xf32>
    %cst_59 = arith.constant 5.000000e-01 : f32
    %144 = vector.broadcast %cst_59 : f32 to vector<8x128xf32>
    %145 = arith.addf %143, %144 : vector<8x128xf32>
    %146 = arith.mulf %17, %124 : vector<8x128xf32>
    %147 = arith.subf %145, %146 : vector<8x128xf32>
    %148 = arith.subf %147, %114 : vector<8x128xf32>
    %cst_60 = arith.constant 2.000000e+00 : f32
    %149 = vector.broadcast %cst_60 : f32 to vector<8x128xf32>
    %150 = arith.mulf %149, %114 : vector<8x128xf32>
    %151 = arith.select %100, %150, %142 : vector<8x128xi1>, vector<8x128xf32>
    %cst_61 = arith.constant 1.000000e+00 : f32
    %152 = vector.broadcast %cst_61 : f32 to vector<8x128xf32>
    %153 = arith.select %102, %152, %151 : vector<8x128xi1>, vector<8x128xf32>
    %cst_62 = arith.constant 2.000000e+00 : f32
    %154 = vector.broadcast %cst_62 : f32 to vector<8x128xf32>
    %155 = arith.mulf %154, %111 : vector<8x128xf32>
    %156 = arith.select %102, %155, %148 : vector<8x128xi1>, vector<8x128xf32>
    %cst_63 = arith.constant 1.000000e+00 : f32
    %157 = vector.broadcast %cst_63 : f32 to vector<8x128xf32>
    %158 = arith.select %100, %157, %156 : vector<8x128xi1>, vector<8x128xf32>
    %159 = arith.mulf %36, %23 : vector<8x128xf32>
    %160 = arith.mulf %159, %98 : vector<8x128xf32>
    %161 = arith.mulf %38, %21 : vector<8x128xf32>
    %162 = arith.mulf %161, %93 : vector<8x128xf32>
    %cst_64 = arith.constant 0.000000e+00 : f32
    %163 = vector.broadcast %cst_64 : f32 to vector<8x128xf32>
    %164 = arith.cmpf oeq, %13, %163 : vector<8x128xf32>
    %165 = math.log1p %160 : vector<8x128xf32>
    %cst_65 = arith.constant 0.000000e+00 : f32
    %166 = vector.broadcast %cst_65 : f32 to vector<8x128xf32>
    %167 = arith.subf %166, %165 : vector<8x128xf32>
    %168 = math.log %153 : vector<8x128xf32>
    %169 = arith.subf %167, %168 : vector<8x128xf32>
    %cst_66 = arith.constant 1.000000e+00 : f32
    %170 = vector.broadcast %cst_66 : f32 to vector<8x128xf32>
    %171 = arith.subf %153, %170 : vector<8x128xf32>
    %cst_67 = arith.constant 5.000000e-01 : f32
    %172 = vector.broadcast %cst_67 : f32 to vector<8x128xf32>
    %173 = arith.mulf %171, %172 : vector<8x128xf32>
    %174 = arith.addf %169, %173 : vector<8x128xf32>
    %175 = arith.mulf %13, %174 : vector<8x128xf32>
    %cst_68 = arith.constant 0.000000e+00 : f32
    %176 = vector.broadcast %cst_68 : f32 to vector<8x128xf32>
    %177 = arith.select %164, %176, %175 : vector<8x128xi1>, vector<8x128xf32>
    %cst_69 = arith.constant 0.000000e+00 : f32
    %178 = vector.broadcast %cst_69 : f32 to vector<8x128xf32>
    %179 = arith.cmpf oeq, %15, %178 : vector<8x128xf32>
    %180 = math.log1p %162 : vector<8x128xf32>
    %cst_70 = arith.constant 0.000000e+00 : f32
    %181 = vector.broadcast %cst_70 : f32 to vector<8x128xf32>
    %182 = arith.subf %181, %180 : vector<8x128xf32>
    %183 = math.log %158 : vector<8x128xf32>
    %184 = arith.subf %182, %183 : vector<8x128xf32>
    %cst_71 = arith.constant 1.000000e+00 : f32
    %185 = vector.broadcast %cst_71 : f32 to vector<8x128xf32>
    %186 = arith.subf %158, %185 : vector<8x128xf32>
    %cst_72 = arith.constant 5.000000e-01 : f32
    %187 = vector.broadcast %cst_72 : f32 to vector<8x128xf32>
    %188 = arith.mulf %186, %187 : vector<8x128xf32>
    %189 = arith.addf %184, %188 : vector<8x128xf32>
    %190 = arith.mulf %15, %189 : vector<8x128xf32>
    %cst_73 = arith.constant 0.000000e+00 : f32
    %191 = vector.broadcast %cst_73 : f32 to vector<8x128xf32>
    %192 = arith.select %179, %191, %190 : vector<8x128xi1>, vector<8x128xf32>
    %cst_74 = arith.constant 1.000000e+00 : f32
    %193 = vector.broadcast %cst_74 : f32 to vector<8x128xf32>
    %194 = arith.subf %193, %93 : vector<8x128xf32>
    %195 = arith.mulf %21, %194 : vector<8x128xf32>
    %cst_75 = arith.constant 1.000000e+00 : f32
    %196 = vector.broadcast %cst_75 : f32 to vector<8x128xf32>
    %197 = arith.subf %196, %98 : vector<8x128xf32>
    %198 = arith.mulf %23, %197 : vector<8x128xf32>
    %199 = arith.addf %195, %198 : vector<8x128xf32>
    %200 = arith.mulf %11, %199 : vector<8x128xf32>
    %cst_76 = arith.constant 5.000000e-01 : f32
    %201 = vector.broadcast %cst_76 : f32 to vector<8x128xf32>
    %202 = arith.mulf %200, %201 : vector<8x128xf32>
    %203 = arith.addf %177, %192 : vector<8x128xf32>
    %204 = arith.addf %203, %202 : vector<8x128xf32>
    %c0_77 = arith.constant 0 : index
    %c0_78 = arith.constant 0 : index
    %205 = vector.load %arg2[%c0_77, %c0_78] : memref<8x128xf32, #tpu.memory_space<vmem>>, vector<8x128xf32>
    tpu.vector_store %arg2[%c0_77, %c0_78], %204 {strides = array<i32>} : memref<8x128xf32, #tpu.memory_space<vmem>>, vector<8x128xf32>,
    return
  }
  func.func @transform_0(%arg0: i32) -> (i32, i32, i32) {
    %c0_i32 = arith.constant 0 : i32
    %c0_i32_0 = arith.constant 0 : i32
    %c0_i32_1 = arith.constant 0 : i32
    return %c0_i32, %arg0, %c0_i32_0 : i32, i32, i32
  }
  func.func @transform_1(%arg0: i32) -> (i32, i32) {
    %c0_i32 = arith.constant 0 : i32
    %c0_i32_0 = arith.constant 0 : i32
    return %arg0, %c0_i32 : i32, i32
  }
}

</mosaic_0001>

<llo_original>
// kernel: tpu_custom_call.1
$region0: #{tpu_custom_call.1}
  #allocation0 [shape = 'u32[]', space=smem, size = 0x4, offset = 0x4, fixed_abs, tag = 'smem constant byte address 0x4 - core index']
  #allocation1 [shape = 'u32[144,128]{1,0:T(1,128)}', space=vmem, size = 0x12000, scoped, tag = 'internal scratch']
  %s0 = inlined_call_operand.hbm [shape: f32[12,16,128], index: 0, kind: input, shape index: {}]
  %s1 = inlined_call_operand.hbm [shape: f32[16,128], index: 1, kind: output, shape index: {}]
  %s2 = sld [smem:[#allocation0]]
  $region41: #{tpu_custom_call.1} parent=0
    _
  %s4 = ssub.s32 1, %s2
  %s5 = scalar_select 0, %s4, %s2
  $region1: #{tpu_custom_call.1} parent=0
    #allocation2 [shape = 'u8[98304]{0}', space=vmem, size = 0x18000, scoped, tag = 'input window, operand 0']
    #allocation3 [shape = 's32[2]{0}', space=sflag, size = 0x8, scoped, tag = 'scoped memory for tpu_custom_call.1']
    #allocation4 [shape = 's32[2]{0}', space=sflag, size = 0x8, scoped, tag = 'scoped memory for tpu_custom_call.1']
    #allocation5 [shape = 'u8[8192]{0}', space=vmem, size = 0x2000, scoped, tag = 'output window, operand 0']
    %6 = vsyncpa [#allocation3], 0
    %s7 = scalar_lea.sflag [#allocation3], 1
    %8 = vsyncpa %s7, 0
    %9 = vsyncpa [#allocation4], 0
    %s10 = scalar_lea.sflag [#allocation4], 1
    %11 = vsyncpa %s10, 0
    loop: start=0, step=1, limit=4
    $region2: #{tpu_custom_call.1} parent=1 // loop_pre_header
      _
    $region3: #{tpu_custom_call.1} parent=1 // loop_header
      %s13 = sphi 0, %s17
      %p14 = scmp.ge.s32.totalorder %s13, 4
      %s23 = sphi 0, %s25
      %s26 = sphi 0, %s23
      %s27 = sphi 0, %s26
      %s43 = sphi 0, %s27
      %s49 = sphi 0, %s51
      %s52 = sphi 0, %s49
      %s53 = sphi 0, %s52
      %s69 = sphi 0, %s53
    $region4: #{tpu_custom_call.1} parent=1 // loop_header_branch
      %16 = sbr.rel (%p14) target = $region8
    $region5: #{tpu_custom_call.1} parent=1 // loop_body
      %s18 = ssub.s32 %s13, 1
      %s19 = ssub.s32 %s13, 2
      %s20 = sadd.s32 %s13, 1
      %s21 = ssub.s32 %s13, %s20
      %p22 = scmp.eq.s32.totalorder %s21, 0
      %s24 = sadd.s32 %s23, 1
      %s25 = scalar_select %p22, %s23, %s24
      %p28 = pneg %p22
      %p29 = scmp.eq.s32.totalorder %s13, 1
      %p30 = por %p28, %p29
      %p31 = scmp.ne.s32.totalorder %s23, %s26
      %p32 = scmp.eq.s32.totalorder %s13, 0
      %p33 = por %p31, %p32
      %p34 = scmp.ne.s32.totalorder %s23, %s26
      %p35 = scmp.eq.s32.totalorder %s18, 1
      %p36 = por %p34, %p35
      %p37 = scmp.ne.s32.totalorder %s26, %s27
      %p38 = scmp.eq.s32.totalorder %s18, 0
      %p39 = por %p37, %p38
      %p40 = scmp.ne.s32.totalorder %s26, %s27
      %p41 = scmp.eq.s32.totalorder %s19, 1
      %p42 = por %p40, %p41
      %p44 = scmp.ne.s32.totalorder %s27, %s43
      %p45 = scmp.eq.s32.totalorder %s19, 0
      %p46 = por %p44, %p45
      %s47 = ssub.s32 %s13, %s20
      %p48 = scmp.eq.s32.totalorder %s47, 0
      %s50 = sadd.s32 %s49, 1
      %s51 = scalar_select %p48, %s49, %s50
      %p54 = pneg %p48
      %p55 = scmp.eq.s32.totalorder %s13, 1
      %p56 = por %p54, %p55
      %p57 = scmp.ne.s32.totalorder %s49, %s52
      %p58 = scmp.eq.s32.totalorder %s13, 0
      %p59 = por %p57, %p58
      %p60 = scmp.ne.s32.totalorder %s49, %s52
      %p61 = scmp.eq.s32.totalorder %s18, 1
      %p62 = por %p60, %p61
      %p63 = scmp.ne.s32.totalorder %s52, %s53
      %p64 = scmp.eq.s32.totalorder %s18, 0
      %p65 = por %p63, %p64
      %p66 = scmp.ne.s32.totalorder %s52, %s53
      %p67 = scmp.eq.s32.totalorder %s19, 1
      %p68 = por %p66, %p67
      %p70 = scmp.ne.s32.totalorder %s53, %s69
      %p71 = scmp.eq.s32.totalorder %s19, 0
      %p72 = por %p70, %p71
      %p73 = scmp.le.s32.totalorder 1, %s13
      %p74 = scmp.lt.s32.totalorder %s13, 3
      %p75 = pnand %p73, %p74
      %p76 = pneg %p75
      // Predicated region
      $region9: #{tpu_custom_call.1} parent=5 // pred_check
        _
      $region10: #{tpu_custom_call.1} parent=5 // pred_check_branch
        %78 = sbr.rel (%p75) target = $region12
      $region11: #{tpu_custom_call.1} parent=5 // pred_region
        %s79 = ssub.s32 %s13, 1
      $region12: #{tpu_custom_call.1} parent=5 // pred_fallthru
        _
      %p80 = scmp.lt.s32.totalorder %s13, 2
      // Predicated region
      $region13: #{tpu_custom_call.1} parent=5 // pred_check
        %p81 = pneg %p80
      $region14: #{tpu_custom_call.1} parent=5 // pred_check_branch
        %83 = sbr.rel (%p81) target = $region16
      $region15: #{tpu_custom_call.1} parent=5 // pred_region
        // Predicated region
        $region17: #{tpu_custom_call.1} parent=15 // pred_check
          %p84 = pneg %p33
        $region18: #{tpu_custom_call.1} parent=15 // pred_check_branch
          %86 = sbr.rel (%p84) target = $region20
        $region19: #{tpu_custom_call.1} parent=15 // pred_region
          %s87 = sand.u32 %s23, 1
          %s88 = scalar_lea.sflag [#allocation3], %s87
          %s89 = sand.u32 %s23, 1
          %s90 = smul.addr %s89, 96
          %s91 = scalar_lea.vmem [#allocation2], %s90
          %s93 = ssub.s32 1536, 1536
          %94 = vsyncadd %s88, %s93
          %s95 = smul.addr %s13, 128
          %s96 = scalar_lea.hbm %s0, %s95
          %s97 = sshll.u32 %s91, 4
          %s98 = int_to_ptr.vmem [resolvable:$true] %s97
          %103 = dma.hbm_to_vmem [thread:$0]  %s96, 1536, %s98, %s88, 256, 128, 8
        $region20: #{tpu_custom_call.1} parent=15 // pred_fallthru
          _
      $region16: #{tpu_custom_call.1} parent=5 // pred_fallthru
        _
      %p104 = scmp.le.s32.totalorder 1, %s13
      %p105 = scmp.lt.s32.totalorder %s13, 3
      %p106 = pnand %p104, %p105
      %p107 = pneg %p106
      // Predicated region
      $region21: #{tpu_custom_call.1} parent=5 // pred_check
        _
      $region22: #{tpu_custom_call.1} parent=5 // pred_check_branch
        %109 = sbr.rel (%p106) target = $region24
      $region23: #{tpu_custom_call.1} parent=5 // pred_region
        %s110 = ssub.s32 %s13, 1
        %s111 = sand.u32 %s26, 1
        %s112 = scalar_lea.sflag [#allocation3], %s111
        %s113 = sand.u32 %s26, 1
        %s114 = smul.addr %s113, 96
        %s115 = scalar_lea.vmem [#allocation2], %s114
        // Predicated region
        $region25: #{tpu_custom_call.1} parent=23 // pred_check
          %p116 = pneg %p39
        $region26: #{tpu_custom_call.1} parent=23 // pred_check_branch
          %118 = sbr.rel (%p116) target = $region28
        $region27: #{tpu_custom_call.1} parent=23 // pred_region
          %119 = dma.done %s112, 1536
        $region28: #{tpu_custom_call.1} parent=23 // pred_fallthru
          _
        %s120 = sand.u32 %s26, 1
        %s121 = scalar_lea.sflag [#allocation3], %s120
        %s122 = sand.u32 %s26, 1
        %s123 = smul.addr %s122, 96
        %s124 = scalar_lea.vmem [#allocation2], %s123
        %p125 = pneg %p39
        %p126 = pneg %p36
        %p127 = pneg %p65
        %p128 = pneg %p62
        %s129 = sand.u32 %s52, 1
        %s130 = scalar_lea.sflag [#allocation4], %s129
        %s131 = sand.u32 %s52, 1
        %s132 = smul.addr %s131, 8
        %s133 = scalar_lea.vmem [#allocation5], %s132
        %v134 = vld [vmem:[%s115] sm:$0xff]
        %s135 = scalar_lea.vmem %s115, 8 [#allocation2]
        %v136 = vld [vmem:[%s135] sm:$0xff]
        %s137 = scalar_lea.vmem %s115, 16 [#allocation2]
        %v138 = vld [vmem:[%s137] sm:$0xff]
        %s139 = scalar_lea.vmem %s115, 24 [#allocation2]
        %v140 = vld [vmem:[%s139] sm:$0xff]
        %s141 = scalar_lea.vmem %s115, 32 [#allocation2]
        %v142 = vld [vmem:[%s141] sm:$0xff]
        %s143 = scalar_lea.vmem %s115, 40 [#allocation2]
        %v144 = vld [vmem:[%s143] sm:$0xff]
        %s145 = scalar_lea.vmem %s115, 48 [#allocation2]
        %v146 = vld [vmem:[%s145] sm:$0xff]
        %s147 = scalar_lea.vmem %s115, 56 [#allocation2]
        %v148 = vld [vmem:[%s147] sm:$0xff]
        %s149 = scalar_lea.vmem %s115, 64 [#allocation2]
        %v150 = vld [vmem:[%s149] sm:$0xff]
        %s151 = scalar_lea.vmem %s115, 72 [#allocation2]
        %v152 = vld [vmem:[%s151] sm:$0xff]
        %s153 = scalar_lea.vmem %s115, 80 [#allocation2]
        %v154 = vld [vmem:[%s153] sm:$0xff]
        %s155 = scalar_lea.vmem %s115, 88 [#allocation2]
        %v156 = vld [vmem:[%s155] sm:$0xff]
        %v157 = vmul.f32 %v142, 1960.0
        %v158 = vmul.f32 %v157, 1.442695
        %v159 = vpow.pop %v158
        %v160 = vsub.f32 %v159, 1.0
        %v161 = vmul.f32 %v160, 0.034
        %v162 = vmul.f32 %v134, %v136
        %v163 = vmul.f32 %v162, %v161
        %v164 = vmul.f32 %v138, %v140
        %v165 = vmul.f32 %v164, %v161
        %v166 = vmul.f32 %v134, %v140
        %v167 = vmul.f32 %v166, %v161
        %v168 = vmul.f32 %v138, %v136
        %v169 = vmul.f32 %v168, %v161
        %vm170 = vcmp.eq.f32.partialorder %v154, 0.0
        %vm171 = vcmp.eq.f32.partialorder %v156, 0.0
        %v172 = vmul.f32 %v165, %v154
        %v173 = vsel %vm170, 1.0, %v172
        %v174 = vmul.f32 %v165, %v156
        %v175 = vsel %vm171, 1.0, %v174
        %v176 = vrcp.pop %v173
        %v177 = vmul.f32 %v176, 0.5
        %v178 = vrcp.pop %v175
        %v179 = vmul.f32 %v178, 0.5
        %v180 = vsel %vm170, 1.0, %v154
        %v181 = vrcp.pop %v180
        %v182 = vmul.f32 %v181, 0.5
        %v183 = vsel %vm171, 1.0, %v156
        %v184 = vrcp.pop %v183
        %v185 = vmul.f32 %v184, 0.5
        %v186 = vmul.f32 %v173, %v173
        %v187 = vmul.f32 %v173, 2.0
        %v188 = vsub.f32 %v175, 1.0
        %v189 = vmul.f32 %v187, %v188
        %v190 = vsub.f32 %v186, %v189
        %v191 = vadd.f32 %v175, 1.0
        %v192 = vmul.f32 %v191, %v191
        %v193 = vadd.f32 %v190, %v192
        %v194 = vrsqrt.pop %v193
        %v195 = vmul.f32 %v193, %v194
        %vm196 = vcmp.eq.f32.partialorder %v193, inf
        %v197 = vsel %vm196, %v193, %v195
        %vm198 = vcmp.eq.f32.partialorder %v193, 0.0
        %v199 = vand.u32 %v193, 2147483648
        %v200 = vsel %vm198, %v199, %v197
        %v201 = vmul.f32 %v200, %v177
        %v202 = vadd.f32 %v201, 0.5
        %v203 = vmul.f32 %v156, %v182
        %v204 = vsub.f32 %v202, %v203
        %v205 = vsub.f32 %v204, %v177
        %v206 = vmul.f32 %v200, %v179
        %v207 = vadd.f32 %v206, 0.5
        %v208 = vmul.f32 %v154, %v185
        %v209 = vsub.f32 %v207, %v208
        %v210 = vsub.f32 %v209, %v179
        %v211 = vmul.f32 %v179, 2.0
        %v212 = vsel %vm170, %v211, %v205
        %v213 = vsel %vm171, 1.0, %v212
        %v214 = vmul.f32 %v177, 2.0
        %v215 = vsel %vm171, %v214, %v210
        %v216 = vsel %vm170, 1.0, %v215
        %vm217 = vcmp.eq.f32.partialorder %v150, 0.0
        %vm218 = vcmp.eq.f32.partialorder %v152, 0.0
        %v219 = vmul.f32 %v163, %v150
        %v220 = vsel %vm217, 1.0, %v219
        %v221 = vmul.f32 %v163, %v152
        %v222 = vsel %vm218, 1.0, %v221
        %v223 = vrcp.pop %v220
        %v224 = vmul.f32 %v223, 0.5
        %v225 = vrcp.pop %v222
        %v226 = vmul.f32 %v225, 0.5
        %v227 = vsel %vm217, 1.0, %v150
        %v228 = vrcp.pop %v227
        %v229 = vmul.f32 %v228, 0.5
        %v230 = vsel %vm218, 1.0, %v152
        %v231 = vrcp.pop %v230
        %v232 = vmul.f32 %v231, 0.5
        %v233 = vmul.f32 %v220, %v220
        %v234 = vmul.f32 %v220, 2.0
        %v235 = vsub.f32 %v222, 1.0
        %v236 = vmul.f32 %v234, %v235
        %v237 = vsub.f32 %v233, %v236
        %v238 = vadd.f32 %v222, 1.0
        %v239 = vmul.f32 %v238, %v238
        %v240 = vadd.f32 %v237, %v239
        %v241 = vrsqrt.pop %v240
        %v242 = vmul.f32 %v240, %v241
        %vm243 = vcmp.eq.f32.partialorder %v240, inf
        %v244 = vsel %vm243, %v240, %v242
        %vm245 = vcmp.eq.f32.partialorder %v240, 0.0
        %v246 = vand.u32 %v240, 2147483648
        %v247 = vsel %vm245, %v246, %v244
        %v248 = vmul.f32 %v247, %v224
        %v249 = vadd.f32 %v248, 0.5
        %v250 = vmul.f32 %v152, %v229
        %v251 = vsub.f32 %v249, %v250
        %v252 = vsub.f32 %v251, %v224
        %v253 = vmul.f32 %v247, %v226
        %v254 = vadd.f32 %v253, 0.5
        %v255 = vmul.f32 %v150, %v232
        %v256 = vsub.f32 %v254, %v255
        %v257 = vsub.f32 %v256, %v226
        %v258 = vmul.f32 %v226, 2.0
        %v259 = vsel %vm217, %v258, %v252
        %v260 = vsel %vm218, 1.0, %v259
        %v261 = vmul.f32 %v224, 2.0
        %v262 = vsel %vm218, %v261, %v257
        %v263 = vsel %vm217, 1.0, %v262
        %v264 = vmul.f32 %v167, %v156
        %v265 = vmul.f32 %v264, %v216
        %v266 = vmul.f32 %v169, %v154
        %v267 = vmul.f32 %v266, %v213
        %vm268 = vcmp.eq.f32.partialorder %v146, 0.0
        %v269 = vadd.f32 %v265, 1.0
        %v270 = vlog2.pop %v269
        %v271 = vmul.f32 %v270, 0.6931472
        %v272 = vmul.f32 -0.5, %v265
        %v273 = vadd.f32 %v272, 1.0
        %v274 = vmul.f32 %v273, %v265
        %v275 = vand.u32 2147483647, %v265
        %vm276 = vcmp.lt.f32.partialorder %v275, 0.0004427343
        %v277 = vsel %vm276, %v274, %v271
        %v278 = vsub.f32 0.0, %v277
        %v279 = vlog2.pop %v260
        %v280 = vmul.f32 %v279, 0.6931472
        %v281 = vsub.f32 %v278, %v280
        %v282 = vsub.f32 %v260, 1.0
        %v283 = vmul.f32 %v282, 0.5
        %v284 = vadd.f32 %v281, %v283
        %v285 = vmul.f32 %v146, %v284
        %v286 = vsel %vm268, 0.0, %v285
        %vm287 = vcmp.eq.f32.partialorder %v148, 0.0
        %v288 = vadd.f32 %v267, 1.0
        %v289 = vlog2.pop %v288
        %v290 = vmul.f32 %v289, 0.6931472
        %v291 = vmul.f32 -0.5, %v267
        %v292 = vadd.f32 %v291, 1.0
        %v293 = vmul.f32 %v292, %v267
        %v294 = vand.u32 2147483647, %v267
        %vm295 = vcmp.lt.f32.partialorder %v294, 0.0004427343
        %v296 = vsel %vm295, %v293, %v290
        %v297 = vsub.f32 0.0, %v296
        %v298 = vlog2.pop %v263
        %v299 = vmul.f32 %v298, 0.6931472
        %v300 = vsub.f32 %v297, %v299
        %v301 = vsub.f32 %v263, 1.0
        %v302 = vmul.f32 %v301, 0.5
        %v303 = vadd.f32 %v300, %v302
        %v304 = vmul.f32 %v148, %v303
        %v305 = vsel %vm287, 0.0, %v304
        %v306 = vsub.f32 1.0, %v213
        %v307 = vmul.f32 %v154, %v306
        %v308 = vsub.f32 1.0, %v216
        %v309 = vmul.f32 %v156, %v308
        %v310 = vadd.f32 %v307, %v309
        %v311 = vmul.f32 %v144, %v310
        %v312 = vmul.f32 %v311, 0.5
        %v313 = vadd.f32 %v286, %v305
        %v314 = vadd.f32 %v313, %v312
        %315 = vst [vmem:[%s133] sm:$0xff] %v314
        %s316 = sand.u32 %s52, 1
        %s317 = scalar_lea.sflag [#allocation4], %s316
        %s318 = sand.u32 %s52, 1
        %s319 = smul.addr %s318, 8
        %s320 = scalar_lea.vmem [#allocation5], %s319
        // Predicated region
        $region29: #{tpu_custom_call.1} parent=23 // pred_check
          %p321 = pneg %p62
        $region30: #{tpu_custom_call.1} parent=23 // pred_check_branch
          %323 = sbr.rel (%p321) target = $region32
        $region31: #{tpu_custom_call.1} parent=23 // pred_region
          %s325 = ssub.s32 128, 128
          %326 = vsyncadd %s317, %s325
          %s327 = smul.addr %s18, 128
          %s328 = scalar_lea.hbm %s1, %s327
          %s330 = sshll.u32 %s320, 4
          %s331 = int_to_ptr.vmem [resolvable:$true] %s330
          %333 = dma.vmem_to_hbm [thread:$0]  %s331, 128, %s328, %s317
        $region32: #{tpu_custom_call.1} parent=23 // pred_fallthru
          _
      $region24: #{tpu_custom_call.1} parent=5 // pred_fallthru
        _
      %p334 = scmp.le.s32.totalorder 2, %s13
      // Predicated region
      $region33: #{tpu_custom_call.1} parent=5 // pred_check
        %p335 = pneg %p334
      $region34: #{tpu_custom_call.1} parent=5 // pred_check_branch
        %337 = sbr.rel (%p335) target = $region36
      $region35: #{tpu_custom_call.1} parent=5 // pred_region
        %s338 = ssub.s32 %s13, 2
        // Predicated region
        $region37: #{tpu_custom_call.1} parent=35 // pred_check
          %p339 = pneg %p68
        $region38: #{tpu_custom_call.1} parent=35 // pred_check_branch
          %341 = sbr.rel (%p339) target = $region40
        $region39: #{tpu_custom_call.1} parent=35 // pred_region
          %s342 = sand.u32 %s53, 1
          %s343 = scalar_lea.sflag [#allocation4], %s342
          %s344 = sand.u32 %s53, 1
          %s345 = smul.addr %s344, 8
          %s346 = scalar_lea.vmem [#allocation5], %s345
          %347 = dma.done %s343, 128
        $region40: #{tpu_custom_call.1} parent=35 // pred_fallthru
          _
      $region36: #{tpu_custom_call.1} parent=5 // pred_fallthru
        _
    $region6: #{tpu_custom_call.1} parent=1 // loop_footer
      %s17 = sadd.s32 1, %s13
    $region7: #{tpu_custom_call.1} parent=1 // loop_footer_branch
      %12 = sbr.rel target = $region3
    $region8: #{tpu_custom_call.1} parent=1 // loop_exit
      _
    %348 = vsyncpa [#allocation3], 1
    %s349 = scalar_lea.sflag [#allocation3], 1
    %350 = vsyncpa %s349, 1
    %351 = vsyncpa [#allocation4], 1
    %s352 = scalar_lea.sflag [#allocation4], 1
    %353 = vsyncpa %s352, 1

</llo_original>
